<compile_context>
chip_gen: v7x
topology: tpu7x:2x2x1
jax: 0.10.0
libtpu: 0.0.40
codegen_flags: <defaults>
</compile_context>

<pallas_src>
import functools

import jax
import jax.numpy as jnp
from jax.experimental import pallas as pl
from jax.experimental.pallas import tpu as pltpu


def _round_up(n, m):
    return ((n + m - 1) // m) * m


def _franka_state_kernel(x_ref, w1_ref, b1_ref, w2_ref, b2_ref, w3_ref, b3_ref,
                         out_ref):
    """One batch tile of the 3-layer MLP. bf16 operands, f32 accumulation."""
    h = jnp.dot(x_ref[...], w1_ref[...],
                preferred_element_type=jnp.float32) + b1_ref[...]
    h = jnp.maximum(h, 0.0).astype(jnp.bfloat16)
    h = jnp.dot(h, w2_ref[...],
                preferred_element_type=jnp.float32) + b2_ref[...]
    h = jnp.maximum(h, 0.0).astype(jnp.bfloat16)
    y = jnp.dot(h, w3_ref[...],
                preferred_element_type=jnp.float32) + b3_ref[...]
    # Single full-width (lane-dense) store for the whole tile.
    out_ref[...] = y.astype(out_ref.dtype)


@functools.partial(jax.jit, static_argnames=("block_b",))
def franka_state_encoder(x, params, *, block_b=2048):
    # bf16 matmul operands; biases stay f32 (added to the f32 accumulators).
    w1 = params["w1"].astype(jnp.bfloat16)
    w2 = params["w2"].astype(jnp.bfloat16)
    w3 = params["w3"].astype(jnp.bfloat16)
    b1 = params["b1"].astype(jnp.float32)
    b2 = params["b2"].astype(jnp.float32)
    b3 = params["b3"].astype(jnp.float32)

    state_dim = w1.shape[0]
    feat_dim = w3.shape[1]

    B = x.shape[0]
    # Mirror x.view(batch_size, state_dim)
    x = x.reshape(B, state_dim).astype(jnp.bfloat16)

    # Batch tile: 8-row aligned, capped at block_b, and capped at ~half of the
    # batch so the "parallel" grid axis has >= 2 steps (v7x has 2 TensorCores).
    half = (B + 1) // 2
    tb = max(8, min(block_b, _round_up(half, 8)))
    grid = (pl.cdiv(B, tb),)   # ragged final block handled by Pallas (no pad)

    flops = 2 * B * (state_dim * 128 + 128 * 128 + 128 * feat_dim)
    bytes_accessed = (2 * B * state_dim            # x (bf16)
                      + 4 * B * feat_dim           # out (f32)
                      + 2 * (state_dim * 128 + 128 * 128 + 128 * feat_dim)
                      + 4 * (128 + 128 + feat_dim))

    out = pl.pallas_call(
        _franka_state_kernel,
        out_shape=jax.ShapeDtypeStruct((B, feat_dim), jnp.float32),
        grid=grid,
        in_specs=[
            pl.BlockSpec((tb, state_dim), lambda i: (i, 0)),    # x: streamed tiles
            pl.BlockSpec((state_dim, 128), lambda i: (0, 0)),   # w1: resident
            pl.BlockSpec((1, 128), lambda i: (0, 0)),           # b1: resident
            pl.BlockSpec((128, 128), lambda i: (0, 0)),         # w2: resident
            pl.BlockSpec((1, 128), lambda i: (0, 0)),           # b2: resident
            pl.BlockSpec((128, feat_dim), lambda i: (0, 0)),    # w3: resident
            pl.BlockSpec((1, feat_dim), lambda i: (0, 0)),      # b3: resident
        ],
        out_specs=pl.BlockSpec((tb, feat_dim), lambda i: (i, 0)),
        compiler_params=pltpu.CompilerParams(
            dimension_semantics=("parallel",)),
        cost_estimate=pl.CostEstimate(
            flops=flops, transcendentals=0, bytes_accessed=bytes_accessed),
    )(x, w1, b1, w2, b2, w3, b3)

    return out


def init_params(key, state_dim=9, state_feat_dim=128):
    """PyTorch-Linear-style init U(-1/sqrt(fan_in), 1/sqrt(fan_in)).

    Weights stored as (in_features, out_features); biases as (1, out_features)
    so they broadcast over the batch (sublane) axis inside the kernel.
    """
    dims = [(state_dim, 128), (128, 128), (128, state_feat_dim)]
    params = {}
    for idx, (fin, fout) in enumerate(dims, start=1):
        key, kw, kb = jax.random.split(key, 3)
        bound = 1.0 / (fin ** 0.5)
        params[f"w{idx}"] = jax.random.uniform(
            kw, (fin, fout), jnp.float32, minval=-bound, maxval=bound)
        params[f"b{idx}"] = jax.random.uniform(
            kb, (1, fout), jnp.float32, minval=-bound, maxval=bound)
    return params


def _reference(x, p):
    """Pure-JAX f32 reference for correctness checking."""
    B = x.shape[0]
    h = jnp.maximum(x.reshape(B, -1) @ p["w1"] + p["b1"], 0.0)
    h = jnp.maximum(h @ p["w2"] + p["b2"], 0.0)
    return h @ p["w3"] + p["b3"]


if __name__ == "__main__":
    key = jax.random.PRNGKey(0)
    kp, k1, k2, k3 = jax.random.split(key, 4)

    state_dim, state_feat_dim = 9, 128
    params = init_params(kp, state_dim, state_feat_dim)

    # bf16 matmul operands -> loose tolerance vs the f32 reference.
    TOL = dict(atol=5e-2, rtol=5e-2)

    # Small check (single grid step, batch divisible by 8).
    batch = 8
    x = jax.random.normal(k1, (batch, state_dim), jnp.float32)
    out = jax.block_until_ready(franka_state_encoder(x, params))
    ref = _reference(x, params)
    assert out.shape == (batch, state_feat_dim), out.shape
    assert out.dtype == jnp.float32, out.dtype
    assert jnp.allclose(out, ref, **TOL), "mismatch vs reference"

    # Ragged final block path: B=50, default tb caps at half-batch -> grid=2,
    # last block partially valid (no host-side pad, no out[:B] slice).
    batch2 = 50
    x2 = jax.random.normal(k2, (batch2, state_dim), jnp.float32)
    out2 = jax.block_until_ready(franka_state_encoder(x2, params))
    ref2 = _reference(x2, params)
    assert out2.shape == (batch2, state_feat_dim), out2.shape
    assert jnp.allclose(out2, ref2, **TOL), "mismatch (ragged tail)"

    # Multi-step grid with explicit smaller tile (grid=3, ragged last block).
    batch3 = 300
    x3 = jax.random.normal(k3, (batch3, state_dim), jnp.float32)
    out3 = jax.block_until_ready(franka_state_encoder(x3, params, block_b=128))
    ref3 = _reference(x3, params)
    assert out3.shape == (batch3, state_feat_dim), out3.shape
    assert jnp.allclose(out3, ref3, **TOL), "mismatch (tiled)"

    print("KERNEL_OK")
</pallas_src>

<mosaic_0001>
module attributes {stable_mosaic.version = 11 : i64} {
  func.func @_franka_state_kernel(%arg0: i32, %arg1: memref<8x9xbf16, #tpu.memory_space<vmem>>, %arg2: memref<9x128xbf16, #tpu.memory_space<vmem>>, %arg3: memref<1x128xf32, #tpu.memory_space<vmem>>, %arg4: memref<128x128xbf16, #tpu.memory_space<vmem>>, %arg5: memref<1x128xf32, #tpu.memory_space<vmem>>, %arg6: memref<128x128xbf16, #tpu.memory_space<vmem>>, %arg7: memref<1x128xf32, #tpu.memory_space<vmem>>, %arg8: memref<8x128xf32, #tpu.memory_space<vmem>>) attributes {dimension_semantics = [#tpu.dimension_semantics<parallel>], iteration_bounds = array<i64: 1>, scalar_prefetch = 0 : i64, scratch_operands = 0 : i64, tpu.core_type = #tpu.core_type<tc>, window_params = [{transform_indices = @transform_0, window_bounds = array<i64: 8, 9>}, {pipeline_mode = #tpu.pipeline_mode<synchronous>, transform_indices = @transform_1, window_bounds = array<i64: 9, 128>}, {pipeline_mode = #tpu.pipeline_mode<synchronous>, transform_indices = @transform_2, window_bounds = array<i64: 1, 128>}, {pipeline_mode = #tpu.pipeline_mode<synchronous>, transform_indices = @transform_3, window_bounds = array<i64: 128, 128>}, {pipeline_mode = #tpu.pipeline_mode<synchronous>, transform_indices = @transform_4, window_bounds = array<i64: 1, 128>}, {pipeline_mode = #tpu.pipeline_mode<synchronous>, transform_indices = @transform_5, window_bounds = array<i64: 128, 128>}, {pipeline_mode = #tpu.pipeline_mode<synchronous>, transform_indices = @transform_6, window_bounds = array<i64: 1, 128>}, {transform_indices = @transform_7, window_bounds = array<i64: 8, 128>}]} {
    %c0 = arith.constant 0 : index
    %c0_0 = arith.constant 0 : index
    %0 = vector.load %arg1[%c0, %c0_0] : memref<8x9xbf16, #tpu.memory_space<vmem>>, vector<8x9xbf16>
    %c0_1 = arith.constant 0 : index
    %c0_2 = arith.constant 0 : index
    %1 = vector.load %arg2[%c0_1, %c0_2] : memref<9x128xbf16, #tpu.memory_space<vmem>>, vector<9x128xbf16>
    %cst = arith.constant dense<0.000000e+00> : vector<8x128xf32>
    %2 = tpu.matmul %0, %1, %cst {dimension_numbers = #tpu.dot_dimension_numbers<[1], [0], [0], [1], [0, 0, 1, 1], [], []>} : vector<8x9xbf16>, vector<9x128xbf16>, vector<8x128xf32> -> vector<8x128xf32>
    %c0_3 = arith.constant 0 : index
    %c0_4 = arith.constant 0 : index
    %3 = vector.load %arg3[%c0_3, %c0_4] : memref<1x128xf32, #tpu.memory_space<vmem>>, vector<1x128xf32>
    %4 = vector.broadcast %3 : vector<1x128xf32> to vector<8x128xf32>
    %5 = arith.addf %2, %4 : vector<8x128xf32>
    %cst_5 = arith.constant 0.000000e+00 : f32
    %6 = vector.broadcast %cst_5 : f32 to vector<8x128xf32>
    %7 = arith.maximumf %5, %6 : vector<8x128xf32>
    %8 = arith.truncf %7 : vector<8x128xf32> to vector<8x128xbf16>
    %c0_6 = arith.constant 0 : index
    %c0_7 = arith.constant 0 : index
    %9 = vector.load %arg4[%c0_6, %c0_7] : memref<128x128xbf16, #tpu.memory_space<vmem>>, vector<128x128xbf16>
    %cst_8 = arith.constant dense<0.000000e+00> : vector<8x128xf32>
    %10 = tpu.matmul %8, %9, %cst_8 {dimension_numbers = #tpu.dot_dimension_numbers<[1], [0], [0], [1], [0, 0, 1, 1], [], []>} : vector<8x128xbf16>, vector<128x128xbf16>, vector<8x128xf32> -> vector<8x128xf32>
    %c0_9 = arith.constant 0 : index
    %c0_10 = arith.constant 0 : index
    %11 = vector.load %arg5[%c0_9, %c0_10] : memref<1x128xf32, #tpu.memory_space<vmem>>, vector<1x128xf32>
    %12 = vector.broadcast %11 : vector<1x128xf32> to vector<8x128xf32>
    %13 = arith.addf %10, %12 : vector<8x128xf32>
    %cst_11 = arith.constant 0.000000e+00 : f32
    %14 = vector.broadcast %cst_11 : f32 to vector<8x128xf32>
    %15 = arith.maximumf %13, %14 : vector<8x128xf32>
    %16 = arith.truncf %15 : vector<8x128xf32> to vector<8x128xbf16>
    %c0_12 = arith.constant 0 : index
    %c0_13 = arith.constant 0 : index
    %17 = vector.load %arg6[%c0_12, %c0_13] : memref<128x128xbf16, #tpu.memory_space<vmem>>, vector<128x128xbf16>
    %cst_14 = arith.constant dense<0.000000e+00> : vector<8x128xf32>
    %18 = tpu.matmul %16, %17, %cst_14 {dimension_numbers = #tpu.dot_dimension_numbers<[1], [0], [0], [1], [0, 0, 1, 1], [], []>} : vector<8x128xbf16>, vector<128x128xbf16>, vector<8x128xf32> -> vector<8x128xf32>
    %c0_15 = arith.constant 0 : index
    %c0_16 = arith.constant 0 : index
    %19 = vector.load %arg7[%c0_15, %c0_16] : memref<1x128xf32, #tpu.memory_space<vmem>>, vector<1x128xf32>
    %20 = vector.broadcast %19 : vector<1x128xf32> to vector<8x128xf32>
    %21 = arith.addf %18, %20 : vector<8x128xf32>
    %c0_17 = arith.constant 0 : index
    %c0_18 = arith.constant 0 : index
    %22 = vector.load %arg8[%c0_17, %c0_18] : memref<8x128xf32, #tpu.memory_space<vmem>>, vector<8x128xf32>
    tpu.vector_store %arg8[%c0_17, %c0_18], %21 {strides = array<i32>} : memref<8x128xf32, #tpu.memory_space<vmem>>, vector<8x128xf32>,
    return
  }
  func.func @transform_0(%arg0: i32) -> (i32, i32) {
    %c0_i32 = arith.constant 0 : i32
    %c0_i32_0 = arith.constant 0 : i32
    return %arg0, %c0_i32 : i32, i32
  }
  func.func @transform_1(%arg0: i32) -> (i32, i32) {
    %c0_i32 = arith.constant 0 : i32
    %c0_i32_0 = arith.constant 0 : i32
    %c0_i32_1 = arith.constant 0 : i32
    return %c0_i32, %c0_i32_0 : i32, i32
  }
  func.func @transform_2(%arg0: i32) -> (i32, i32) {
    %c0_i32 = arith.constant 0 : i32
    %c0_i32_0 = arith.constant 0 : i32
    %c0_i32_1 = arith.constant 0 : i32
    return %c0_i32, %c0_i32_0 : i32, i32
  }
  func.func @transform_3(%arg0: i32) -> (i32, i32) {
    %c0_i32 = arith.constant 0 : i32
    %c0_i32_0 = arith.constant 0 : i32
    %c0_i32_1 = arith.constant 0 : i32
    return %c0_i32, %c0_i32_0 : i32, i32
  }
  func.func @transform_4(%arg0: i32) -> (i32, i32) {
    %c0_i32 = arith.constant 0 : i32
    %c0_i32_0 = arith.constant 0 : i32
    %c0_i32_1 = arith.constant 0 : i32
    return %c0_i32, %c0_i32_0 : i32, i32
  }
  func.func @transform_5(%arg0: i32) -> (i32, i32) {
    %c0_i32 = arith.constant 0 : i32
    %c0_i32_0 = arith.constant 0 : i32
    %c0_i32_1 = arith.constant 0 : i32
    return %c0_i32, %c0_i32_0 : i32, i32
  }
  func.func @transform_6(%arg0: i32) -> (i32, i32) {
    %c0_i32 = arith.constant 0 : i32
    %c0_i32_0 = arith.constant 0 : i32
    %c0_i32_1 = arith.constant 0 : i32
    return %c0_i32, %c0_i32_0 : i32, i32
  }
  func.func @transform_7(%arg0: i32) -> (i32, i32) {
    %c0_i32 = arith.constant 0 : i32
    %c0_i32_0 = arith.constant 0 : i32
    return %arg0, %c0_i32 : i32, i32
  }
}

</mosaic_0001>

<llo_original>
// kernel: franka_state_encoder.1
$region0: #{franka_state_encoder.1}
  #allocation0 [shape = 'u32[]', space=smem, size = 0x4, offset = 0x4, fixed_abs, tag = 'smem constant byte address 0x4 - core index']
  #allocation1 [shape = 'u32[144,128]{1,0:T(1,128)}', space=vmem, size = 0x12000, scoped, tag = 'internal scratch']
  %s0 = inlined_call_operand.vmem [shape: bf16[8,9], index: 0, kind: input, shape index: {}]
  %s1 = inlined_call_operand.vmem [shape: bf16[9,128], index: 1, kind: input, shape index: {}]
  %s2 = inlined_call_operand.vmem [shape: f32[1,128], index: 2, kind: input, shape index: {}]
  %s3 = inlined_call_operand.vmem [shape: bf16[128,128], index: 3, kind: input, shape index: {}]
  %s4 = inlined_call_operand.vmem [shape: f32[1,128], index: 4, kind: input, shape index: {}]
  %s5 = inlined_call_operand.vmem [shape: bf16[128,128], index: 5, kind: input, shape index: {}]
  %s6 = inlined_call_operand.vmem [shape: f32[1,128], index: 6, kind: input, shape index: {}]
  %s7 = inlined_call_operand.hbm [shape: f32[8,128], index: 7, kind: output, shape index: {}]
  %s8 = sld [smem:[#allocation0]]
  $region38: #{franka_state_encoder.1} parent=0
    _
  %s10 = ssub.s32 1, %s8
  %s11 = scalar_select 0, %s10, %s8
  $region1: #{franka_state_encoder.1} parent=0
    #allocation2 [shape = 'u8[4096]{0}', space=vmem, size = 0x1000, scoped, tag = 'output window, operand 0, single buffered']
    #allocation3 [shape = 's32[1]{0}', space=sflag, size = 0x4, scoped, tag = 'scoped memory for franka_state_encoder.1']
    %12 = vsyncpa [#allocation3], 0
    // Predicated region
    $region2: #{franka_state_encoder.1} parent=1 // pred_check
      _
    $region3: #{franka_state_encoder.1} parent=1 // pred_check_branch
      %14 = sbr.rel (0) target = $region5
    $region4: #{franka_state_encoder.1} parent=1 // pred_region
      _
    $region5: #{franka_state_encoder.1} parent=1 // pred_fallthru
      _
    // Predicated region
    $region6: #{franka_state_encoder.1} parent=1 // pred_check
      _
    $region7: #{franka_state_encoder.1} parent=1 // pred_check_branch
      %16 = sbr.rel (0) target = $region9
    $region8: #{franka_state_encoder.1} parent=1 // pred_region
      _
    $region9: #{franka_state_encoder.1} parent=1 // pred_fallthru
      _
    // Predicated region
    $region10: #{franka_state_encoder.1} parent=1 // pred_check
      _
    $region11: #{franka_state_encoder.1} parent=1 // pred_check_branch
      %18 = sbr.rel (0) target = $region13
    $region12: #{franka_state_encoder.1} parent=1 // pred_region
      _
    $region13: #{franka_state_encoder.1} parent=1 // pred_fallthru
      _
    // Predicated region
    $region14: #{franka_state_encoder.1} parent=1 // pred_check
      _
    $region15: #{franka_state_encoder.1} parent=1 // pred_check_branch
      %20 = sbr.rel (0) target = $region17
    $region16: #{franka_state_encoder.1} parent=1 // pred_region
      _
    $region17: #{franka_state_encoder.1} parent=1 // pred_fallthru
      _
    // Predicated region
    $region18: #{franka_state_encoder.1} parent=1 // pred_check
      _
    $region19: #{franka_state_encoder.1} parent=1 // pred_check_branch
      %22 = sbr.rel (0) target = $region21
    $region20: #{franka_state_encoder.1} parent=1 // pred_region
      _
    $region21: #{franka_state_encoder.1} parent=1 // pred_fallthru
      _
    // Predicated region
    $region22: #{franka_state_encoder.1} parent=1 // pred_check
      _
    $region23: #{franka_state_encoder.1} parent=1 // pred_check_branch
      %24 = sbr.rel (0) target = $region25
    $region24: #{franka_state_encoder.1} parent=1 // pred_region
      _
    $region25: #{franka_state_encoder.1} parent=1 // pred_fallthru
      _
    // Predicated region
    $region26: #{franka_state_encoder.1} parent=1 // pred_check
      _
    $region27: #{franka_state_encoder.1} parent=1 // pred_check_branch
      %26 = sbr.rel (0) target = $region29
    $region28: #{franka_state_encoder.1} parent=1 // pred_region
      _
    $region29: #{franka_state_encoder.1} parent=1 // pred_fallthru
      _
    %v28 = vld [vmem:[%s0] sm:$0xf]
    %v29 = vld [vmem:[%s1] sm:$0xf]
    %v30 = vld [vmem:[%s1 + $0x4] sm:$0x1]
    %v31 = vld [vmem:[%s2] sm:$0x1]
    %v33 = vlaneseq
    %v34 = vshrl.u32 %v33, 7
    %v35 = vsub.s32 0, %v34
    %v36 = vrot.slane %v31, %v35
    %v40 = vunpack.c.l.b16 %v29
    %v41 = vunpack.c.l.b16 %v30
    %v42 = vpack.c.b16 %v41, %v40
    %vm43 = vcmask 72704
    %v45 = vsel %vm43, %v28, 0
    %vm47 = vcmask 1043456
    %vm48 = vcmask 1044480
    %v49 = vsel %vm47, 4294967295, 65535
    %v50 = vsel %vm48, %v49, 0
    %v52 = vand.u32 %v42, %v50
    %54 = vmatprep.subr.bf16.mxu0 0
    %55 = vmatpush1.bf16.msra.mxu0 %v52
    %56 = vmatprep.subr.bf16.mxu0 0
    %57 = vmatpush1.bf16.msra.mxu0 0
    %58 = vmatprep.subr.bf16.mxu0 0
    %59 = vmatpush1.bf16.msra.mxu0 0
    %60 = vmatprep.subr.bf16.mxu0 0
    %61 = vmatpush1.bf16.msra.mxu0 0
    %62 = vmatprep.subr.bf16.mxu0 0
    %63 = vmatpush1.bf16.msra.mxu0 0
    %64 = vmatprep.subr.bf16.mxu0 0
    %65 = vmatpush1.bf16.msra.mxu0 0
    %66 = vmatprep.subr.bf16.mxu0 0
    %67 = vmatpush1.bf16.msra.mxu0 0
    %68 = vmatprep.subr.bf16.mxu0 0
    %69 = vmatpush1.bf16.msra.mxu0 0
    %70 = vmatprep.subr.bf16.mxu0 0
    %71 = vmatpush1.bf16.msra.mxu0 0
    %72 = vmatprep.subr.bf16.mxu0 0
    %73 = vmatpush1.bf16.msra.mxu0 0
    %74 = vmatprep.subr.bf16.mxu0 0
    %75 = vmatpush1.bf16.msra.mxu0 0
    %76 = vmatprep.subr.bf16.mxu0 0
    %77 = vmatpush1.bf16.msra.mxu0 0
    %78 = vmatprep.subr.bf16.mxu0 0
    %79 = vmatpush1.bf16.msra.mxu0 0
    %80 = vmatprep.subr.bf16.mxu0 0
    %81 = vmatpush1.bf16.msra.mxu0 0
    %82 = vmatprep.subr.bf16.mxu0 0
    %83 = vmatpush1.bf16.msra.mxu0 0
    %84 = vmatprep.subr.bf16.mxu0 0
    %85 = vmatpush1.bf16.msra.mxu0 0
    %86 = vmatprep.mubr.bf16.mxu0 0
    %87 = vmatmul.mubr.bf16.gmra.mrb[0].mxu0 %v45
    %v88 = vpop.f32.mrb[0].mxu0
    %v89 = vadd.f32 %v36, %v88
    %v90 = vpop.f32.mrb[0].mxu0
    %v91 = vpop.f32.mrb[0].mxu0
    %v92 = vpop.f32.mrb[0].mxu0
    %93 = vdwg.mxu0
    %v94 = vmax.f32 %v89, 0.0
    %v95 = vpack.c.bf16 %v94, %v94
    %v96 = vld [vmem:[%s3] sm:$0xf]
    %v97 = vld [vmem:[%s3 + $0x4] sm:$0xf]
    %v98 = vld [vmem:[%s3 + $0x8] sm:$0xf]
    %v99 = vld [vmem:[%s3 + $0xc] sm:$0xf]
    %v100 = vld [vmem:[%s3 + $0x10] sm:$0xf]
    %v101 = vld [vmem:[%s3 + $0x14] sm:$0xf]
    %v102 = vld [vmem:[%s3 + $0x18] sm:$0xf]
    %v103 = vld [vmem:[%s3 + $0x1c] sm:$0xf]
    %v104 = vld [vmem:[%s3 + $0x20] sm:$0xf]
    %v105 = vld [vmem:[%s3 + $0x24] sm:$0xf]
    %v106 = vld [vmem:[%s3 + $0x28] sm:$0xf]
    %v107 = vld [vmem:[%s3 + $0x2c] sm:$0xf]
    %v108 = vld [vmem:[%s3 + $0x30] sm:$0xf]
    %v109 = vld [vmem:[%s3 + $0x34] sm:$0xf]
    %v110 = vld [vmem:[%s3 + $0x38] sm:$0xf]
    %v111 = vld [vmem:[%s3 + $0x3c] sm:$0xf]
    %v112 = vld [vmem:[%s4] sm:$0x1]
    %v114 = vlaneseq
    %v115 = vshrl.u32 %v114, 7
    %v116 = vsub.s32 0, %v115
    %v117 = vrot.slane %v112, %v116
    %v135 = vunpack.c.l.b16 %v96
    %v136 = vunpack.c.l.b16 %v97
    %v137 = vunpack.c.l.b16 %v98
    %v138 = vunpack.c.l.b16 %v99
    %v139 = vunpack.c.l.b16 %v100
    %v140 = vunpack.c.l.b16 %v101
    %v141 = vunpack.c.l.b16 %v102
    %v142 = vunpack.c.l.b16 %v103
    %v143 = vunpack.c.l.b16 %v104
    %v144 = vunpack.c.l.b16 %v105
    %v145 = vunpack.c.l.b16 %v106
    %v146 = vunpack.c.l.b16 %v107
    %v147 = vunpack.c.l.b16 %v108
    %v148 = vunpack.c.l.b16 %v109
    %v149 = vunpack.c.l.b16 %v110
    %v150 = vunpack.c.l.b16 %v111
    %v151 = vpack.c.b16 %v136, %v135
    %v152 = vpack.c.b16 %v138, %v137
    %v153 = vpack.c.b16 %v140, %v139
    %v154 = vpack.c.b16 %v142, %v141
    %v155 = vpack.c.b16 %v144, %v143
    %v156 = vpack.c.b16 %v146, %v145
    %v157 = vpack.c.b16 %v148, %v147
    %v158 = vpack.c.b16 %v150, %v149
    %167 = vmatprep.subr.bf16.mxu0 0
    %168 = vmatpush1.bf16.msra.mxu0 %v151
    %169 = vmatprep.subr.bf16.mxu0 0
    %170 = vmatpush1.bf16.msra.mxu0 %v152
    %171 = vmatprep.subr.bf16.mxu0 0
    %172 = vmatpush1.bf16.msra.mxu0 %v153
    %173 = vmatprep.subr.bf16.mxu0 0
    %174 = vmatpush1.bf16.msra.mxu0 %v154
    %175 = vmatprep.subr.bf16.mxu0 0
    %176 = vmatpush1.bf16.msra.mxu0 %v155
    %177 = vmatprep.subr.bf16.mxu0 0
    %178 = vmatpush1.bf16.msra.mxu0 %v156
    %179 = vmatprep.subr.bf16.mxu0 0
    %180 = vmatpush1.bf16.msra.mxu0 %v157
    %181 = vmatprep.subr.bf16.mxu0 0
    %182 = vmatpush1.bf16.msra.mxu0 %v158
    %183 = vmatprep.subr.bf16.mxu0 0
    %184 = vmatpush1.bf16.msra.mxu0 0
    %185 = vmatprep.subr.bf16.mxu0 0
    %186 = vmatpush1.bf16.msra.mxu0 0
    %187 = vmatprep.subr.bf16.mxu0 0
    %188 = vmatpush1.bf16.msra.mxu0 0
    %189 = vmatprep.subr.bf16.mxu0 0
    %190 = vmatpush1.bf16.msra.mxu0 0
    %191 = vmatprep.subr.bf16.mxu0 0
    %192 = vmatpush1.bf16.msra.mxu0 0
    %193 = vmatprep.subr.bf16.mxu0 0
    %194 = vmatpush1.bf16.msra.mxu0 0
    %195 = vmatprep.subr.bf16.mxu0 0
    %196 = vmatpush1.bf16.msra.mxu0 0
    %197 = vmatprep.subr.bf16.mxu0 0
    %198 = vmatpush1.bf16.msra.mxu0 0
    %199 = vmatprep.mubr.bf16.mxu0 0
    %200 = vmatmul.mubr.bf16.gmra.mrb[0].mxu0 %v95
    %v201 = vpop.f32.mrb[0].mxu0
    %v202 = vadd.f32 %v117, %v201
    %v203 = vpop.f32.mrb[0].mxu0
    %v204 = vpop.f32.mrb[0].mxu0
    %v205 = vpop.f32.mrb[0].mxu0
    %206 = vdwg.mxu0
    %v207 = vmax.f32 %v202, 0.0
    %v208 = vpack.c.bf16 %v207, %v207
    %v209 = vld [vmem:[%s5] sm:$0xf]
    %v210 = vld [vmem:[%s5 + $0x4] sm:$0xf]
    %v211 = vld [vmem:[%s5 + $0x8] sm:$0xf]
    %v212 = vld [vmem:[%s5 + $0xc] sm:$0xf]
    %v213 = vld [vmem:[%s5 + $0x10] sm:$0xf]
    %v214 = vld [vmem:[%s5 + $0x14] sm:$0xf]
    %v215 = vld [vmem:[%s5 + $0x18] sm:$0xf]
    %v216 = vld [vmem:[%s5 + $0x1c] sm:$0xf]
    %v217 = vld [vmem:[%s5 + $0x20] sm:$0xf]
    %v218 = vld [vmem:[%s5 + $0x24] sm:$0xf]
    %v219 = vld [vmem:[%s5 + $0x28] sm:$0xf]
    %v220 = vld [vmem:[%s5 + $0x2c] sm:$0xf]
    %v221 = vld [vmem:[%s5 + $0x30] sm:$0xf]
    %v222 = vld [vmem:[%s5 + $0x34] sm:$0xf]
    %v223 = vld [vmem:[%s5 + $0x38] sm:$0xf]
    %v224 = vld [vmem:[%s5 + $0x3c] sm:$0xf]
    %v225 = vld [vmem:[%s6] sm:$0x1]
    %v227 = vlaneseq
    %v228 = vshrl.u32 %v227, 7
    %v229 = vsub.s32 0, %v228
    %v230 = vrot.slane %v225, %v229
    %v248 = vunpack.c.l.b16 %v209
    %v249 = vunpack.c.l.b16 %v210
    %v250 = vunpack.c.l.b16 %v211
    %v251 = vunpack.c.l.b16 %v212
    %v252 = vunpack.c.l.b16 %v213
    %v253 = vunpack.c.l.b16 %v214
    %v254 = vunpack.c.l.b16 %v215
    %v255 = vunpack.c.l.b16 %v216
    %v256 = vunpack.c.l.b16 %v217
    %v257 = vunpack.c.l.b16 %v218
    %v258 = vunpack.c.l.b16 %v219
    %v259 = vunpack.c.l.b16 %v220
    %v260 = vunpack.c.l.b16 %v221
    %v261 = vunpack.c.l.b16 %v222
    %v262 = vunpack.c.l.b16 %v223
    %v263 = vunpack.c.l.b16 %v224
    %v264 = vpack.c.b16 %v249, %v248
    %v265 = vpack.c.b16 %v251, %v250
    %v266 = vpack.c.b16 %v253, %v252
    %v267 = vpack.c.b16 %v255, %v254
    %v268 = vpack.c.b16 %v257, %v256
    %v269 = vpack.c.b16 %v259, %v258
    %v270 = vpack.c.b16 %v261, %v260
    %v271 = vpack.c.b16 %v263, %v262
    %280 = vmatprep.subr.bf16.mxu0 0
    %281 = vmatpush1.bf16.msra.mxu0 %v264
    %282 = vmatprep.subr.bf16.mxu0 0
    %283 = vmatpush1.bf16.msra.mxu0 %v265
    %284 = vmatprep.subr.bf16.mxu0 0
    %285 = vmatpush1.bf16.msra.mxu0 %v266
    %286 = vmatprep.subr.bf16.mxu0 0
    %287 = vmatpush1.bf16.msra.mxu0 %v267
    %288 = vmatprep.subr.bf16.mxu0 0
    %289 = vmatpush1.bf16.msra.mxu0 %v268
    %290 = vmatprep.subr.bf16.mxu0 0
    %291 = vmatpush1.bf16.msra.mxu0 %v269
    %292 = vmatprep.subr.bf16.mxu0 0
    %293 = vmatpush1.bf16.msra.mxu0 %v270
    %294 = vmatprep.subr.bf16.mxu0 0
    %295 = vmatpush1.bf16.msra.mxu0 %v271
    %296 = vmatprep.subr.bf16.mxu0 0
    %297 = vmatpush1.bf16.msra.mxu0 0
    %298 = vmatprep.subr.bf16.mxu0 0
    %299 = vmatpush1.bf16.msra.mxu0 0
    %300 = vmatprep.subr.bf16.mxu0 0
    %301 = vmatpush1.bf16.msra.mxu0 0
    %302 = vmatprep.subr.bf16.mxu0 0
    %303 = vmatpush1.bf16.msra.mxu0 0
    %304 = vmatprep.subr.bf16.mxu0 0
    %305 = vmatpush1.bf16.msra.mxu0 0
    %306 = vmatprep.subr.bf16.mxu0 0
    %307 = vmatpush1.bf16.msra.mxu0 0
    %308 = vmatprep.subr.bf16.mxu0 0
    %309 = vmatpush1.bf16.msra.mxu0 0
    %310 = vmatprep.subr.bf16.mxu0 0
    %311 = vmatpush1.bf16.msra.mxu0 0
    %312 = vmatprep.mubr.bf16.mxu0 0
    %313 = vmatmul.mubr.bf16.gmra.mrb[0].mxu0 %v208
    %v314 = vpop.f32.mrb[0].mxu0
    %v315 = vadd.f32 %v230, %v314
    %v316 = vpop.f32.mrb[0].mxu0
    %v317 = vpop.f32.mrb[0].mxu0
    %v318 = vpop.f32.mrb[0].mxu0
    %319 = vdwg.mxu0
    %320 = vst [vmem:[#allocation2] sm:$0xff] %v315
    // Predicated region
    $region30: #{franka_state_encoder.1} parent=1 // pred_check
      _
    $region31: #{franka_state_encoder.1} parent=1 // pred_check_branch
      %322 = sbr.rel (0) target = $region33
    $region32: #{franka_state_encoder.1} parent=1 // pred_region
      %s324 = ssub.s32 128, 128
      %325 = vsyncadd [#allocation3], %s324
      %s327 = sshll.u32 [#allocation2], 4
      %s328 = int_to_ptr.vmem [resolvable:$true] %s327
      %330 = dma.vmem_to_hbm [thread:$0]  %s328, 128, %s7, [#allocation3]
    $region33: #{franka_state_encoder.1} parent=1 // pred_fallthru
      _
    // Predicated region
    $region34: #{franka_state_encoder.1} parent=1 // pred_check
      _
    $region35: #{franka_state_encoder.1} parent=1 // pred_check_branch
      %332 = sbr.rel (0) target = $region37
    $region36: #{franka_state_encoder.1} parent=1 // pred_region
      %333 = dma.done [#allocation3], 128
    $region37: #{franka_state_encoder.1} parent=1 // pred_fallthru
      _
    %334 = vsyncpa [#allocation3], 1

</llo_original>
